<compile_context>
chip_gen: v7x
topology: tpu7x:2x2x1
jax: 0.10.0
libtpu: 0.0.40
codegen_flags: <defaults>
</compile_context>

<pallas_src>
import functools

import jax
import jax.numpy as jnp
from jax.experimental import pallas as pl
from jax.experimental.pallas import tpu as pltpu


def _round_up(x, m):
    return ((x + m - 1) // m) * m


def _num_tensorcores():
    # v7x has 2 TensorCores per chip; keep the grid >= 2 there so both get work.
    try:
        kind = jax.devices()[0].device_kind.lower()
    except Exception:
        return 1
    return 2 if "v7" in kind else 1


def mlp_kernel(xT_ref, w_in_ref, b_in_ref, w1_ref, b1_ref,
               w2_ref, b2_ref, wp_ref, bp_ref, o_ref, *, n_layer):
    """Transposed-layout MLP: activations are (hidden, batch_tile), batch on lanes."""
    # Hoist all weight/bias reads once (no redundant VMEM loads / broadcasts
    # inside the unrolled hidden-layer loop).
    xT = xT_ref[...]                           # (n_feature, bt)   lane-dense
    w_in, b_in = w_in_ref[...], b_in_ref[...]  # (n1, n_feature), (n1, 1)
    w1, b1 = w1_ref[...], b1_ref[...]          # (n2, n1),        (n2, 1)
    w2, b2 = w2_ref[...], b2_ref[...]          # (n2, n2),        (n2, 1)
    wp, bp = wp_ref[...], bp_ref[...]          # (n_out, n2),     (n_out, 1)

    # out^T = relu(W^T @ x^T + b) -- batch stays on the lane axis throughout.
    act = jnp.maximum(
        jnp.dot(w_in, xT, preferred_element_type=jnp.float32) + b_in, 0.0)
    act = jnp.maximum(
        jnp.dot(w1, act, preferred_element_type=jnp.float32) + b1, 0.0)

    def hidden2(a):
        return jnp.maximum(
            jnp.dot(w2, a, preferred_element_type=jnp.float32) + b2, 0.0)

    # n_layer is a static Python int (same weights reused, like the PyTorch loop).
    if n_layer <= 16:
        for _ in range(n_layer):               # short: full static unroll
            act = hidden2(act)
    else:                                      # long: bounded live ranges
        act = jax.lax.fori_loop(0, n_layer, lambda _, a: hidden2(a), act,
                                unroll=8)

    # (n_out, bt) result, already lane-dense: unmasked full-lane stores.
    o_ref[...] = (jnp.dot(wp, act, preferred_element_type=jnp.float32)
                  + bp).astype(o_ref.dtype)


def net_forward(x, params, *, n_layer, max_batch_tile=4096):
    """x: (B, n_feature) float32. params: dict of (in,out) weights and (1,out) biases.

    Returns (B, n_output).
    """
    B, n_feature = x.shape
    n1 = params["w_in"].shape[1]
    n2 = params["w2"].shape[1]
    n_output = params["wp"].shape[1]

    # ---- grid / tile shaping -------------------------------------------------
    # Pad batch to a multiple of 128 so the lane axis of every block is dense.
    Bp = _round_up(max(B, 1), 128)
    if _num_tensorcores() >= 2 and Bp >= 256:
        # v7x: keep >= 2 grid steps so both TensorCores get work.
        bt = _round_up(pl.cdiv(Bp, 2), 128)
    else:
        # v5e/v6e: one big tile -> single grid step, no per-step overhead.
        bt = Bp
    bt = min(bt, _round_up(max_batch_tile, 128))
    Bp = _round_up(Bp, bt)
    grid = Bp // bt

    # ---- transposed operands -------------------------------------------------
    xT = x.T                                   # (n_feature, B) -- ~KBs, negligible
    if Bp != B:
        # TODO(synk): for very large ragged B, handle the tail tile in-kernel
        # instead of materializing a padded copy of x.
        xT = jnp.pad(xT, ((0, 0), (0, Bp - B)))

    w_in_t = params["w_in"].T                  # (n1, n_feature)
    w1_t = params["w1"].T                      # (n2, n1)
    w2_t = params["w2"].T                      # (n2, n2)
    wp_t = params["wp"].T                      # (n_out, n2)
    b_in_c = params["b_in"].reshape(n1, 1)     # biases broadcast along lanes
    b1_c = params["b1"].reshape(n2, 1)
    b2_c = params["b2"].reshape(n2, 1)
    bp_c = params["bp"].reshape(n_output, 1)

    def whole(shape):
        # Constant-index (resident) weight/bias block.
        return pl.BlockSpec(shape, lambda i: (0, 0))

    flops = 2 * Bp * (n_feature * n1 + n1 * n2
                      + n_layer * n2 * n2 + n2 * n_output)
    weight_bytes = 4 * (n_feature * n1 + n1 * n2 + n2 * n2 + n2 * n_output
                        + n1 + 2 * n2 + n_output)
    cost = pl.CostEstimate(flops=flops, transcendentals=0,
                           bytes_accessed=4 * n_feature * Bp + weight_bytes
                           + 4 * n_output * Bp)

    kernel = functools.partial(mlp_kernel, n_layer=n_layer)

    out_t = pl.pallas_call(
        kernel,
        # Lane-dense output layout: (n_output, Bp); transposed back below.
        out_shape=jax.ShapeDtypeStruct((n_output, Bp), x.dtype),
        grid_spec=pltpu.PrefetchScalarGridSpec(
            num_scalar_prefetch=0,
            grid=(grid,),
            in_specs=[
                pl.BlockSpec((n_feature, bt), lambda i: (0, i)),
                whole((n1, n_feature)), whole((n1, 1)),
                whole((n2, n1)), whole((n2, 1)),
                whole((n2, n2)), whole((n2, 1)),
                whole((n_output, n2)), whole((n_output, 1)),
            ],
            out_specs=pl.BlockSpec((n_output, bt), lambda i: (0, i)),
        ),
        compiler_params=pltpu.CompilerParams(
            dimension_semantics=("parallel",)),
        cost_estimate=cost,
    )(xT, w_in_t, b_in_c, w1_t, b1_c, w2_t, b2_c, wp_t, bp_c)

    return out_t.T[:B]


def init_params(key, n_feature, n_output, n_neuron1, n_neuron2):
    """Deterministic synthetic init (uniform, like torch.nn.Linear's default scale)."""
    ks = jax.random.split(key, 8)

    def lin(kw, kb, fan_in, fan_out):
        bound = 1.0 / jnp.sqrt(fan_in)
        w = jax.random.uniform(kw, (fan_in, fan_out), jnp.float32, -bound, bound)
        b = jax.random.uniform(kb, (1, fan_out), jnp.float32, -bound, bound)
        return w, b

    w_in, b_in = lin(ks[0], ks[1], n_feature, n_neuron1)
    w1, b1 = lin(ks[2], ks[3], n_neuron1, n_neuron2)
    w2, b2 = lin(ks[4], ks[5], n_neuron2, n_neuron2)
    wp, bp = lin(ks[6], ks[7], n_neuron2, n_output)
    return dict(w_in=w_in, b_in=b_in, w1=w1, b1=b1, w2=w2, b2=b2, wp=wp, bp=bp)


def net_forward_ref(x, p, *, n_layer):
    out = jnp.maximum(x @ p["w_in"] + p["b_in"], 0.0)
    out = jnp.maximum(out @ p["w1"] + p["b1"], 0.0)
    for _ in range(n_layer):
        out = jnp.maximum(out @ p["w2"] + p["b2"], 0.0)
    return out @ p["wp"] + p["bp"]


if __name__ == "__main__":
    # Boston housing: 13 features, 1 output; ~500 rows (ragged vs. the tile,
    # exercised on purpose), small hidden sizes.
    n_feature, n_output = 13, 1
    n_neuron1, n_neuron2 = 32, 32
    n_layer = 2
    batch = 500

    key = jax.random.PRNGKey(0)
    kx, kp = jax.random.split(key)
    x = jax.random.normal(kx, (batch, n_feature), jnp.float32)
    params = init_params(kp, n_feature, n_output, n_neuron1, n_neuron2)

    out = net_forward(x, params, n_layer=n_layer)
    out = jax.block_until_ready(out)

    ref = net_forward_ref(x, params, n_layer=n_layer)
    assert out.shape == (batch, n_output)
    assert jnp.allclose(out, ref, atol=1e-4, rtol=1e-4), "mismatch vs JAX reference"

    print("KERNEL_OK")
</pallas_src>

<mosaic_0001>
module attributes {stable_mosaic.version = 11 : i64} {
  func.func @mlp_kernel(%arg0: i32, %arg1: memref<13x512xf32, #tpu.memory_space<vmem>>, %arg2: memref<32x13xf32, #tpu.memory_space<vmem>>, %arg3: memref<32x1xf32, #tpu.memory_space<vmem>>, %arg4: memref<32x32xf32, #tpu.memory_space<vmem>>, %arg5: memref<32x1xf32, #tpu.memory_space<vmem>>, %arg6: memref<32x32xf32, #tpu.memory_space<vmem>>, %arg7: memref<32x1xf32, #tpu.memory_space<vmem>>, %arg8: memref<1x32xf32, #tpu.memory_space<vmem>>, %arg9: memref<1x1xf32, #tpu.memory_space<vmem>>, %arg10: memref<1x512xf32, #tpu.memory_space<vmem>>) attributes {dimension_semantics = [#tpu.dimension_semantics<parallel>], iteration_bounds = array<i64: 1>, scalar_prefetch = 0 : i64, scratch_operands = 0 : i64, tpu.core_type = #tpu.core_type<tc>, window_params = [{transform_indices = @transform_0, window_bounds = array<i64: 13, 512>}, {pipeline_mode = #tpu.pipeline_mode<synchronous>, transform_indices = @transform_1, window_bounds = array<i64: 32, 13>}, {pipeline_mode = #tpu.pipeline_mode<synchronous>, transform_indices = @transform_2, window_bounds = array<i64: 32, 1>}, {pipeline_mode = #tpu.pipeline_mode<synchronous>, transform_indices = @transform_3, window_bounds = array<i64: 32, 32>}, {pipeline_mode = #tpu.pipeline_mode<synchronous>, transform_indices = @transform_4, window_bounds = array<i64: 32, 1>}, {pipeline_mode = #tpu.pipeline_mode<synchronous>, transform_indices = @transform_5, window_bounds = array<i64: 32, 32>}, {pipeline_mode = #tpu.pipeline_mode<synchronous>, transform_indices = @transform_6, window_bounds = array<i64: 32, 1>}, {pipeline_mode = #tpu.pipeline_mode<synchronous>, transform_indices = @transform_7, window_bounds = array<i64: 1, 32>}, {pipeline_mode = #tpu.pipeline_mode<synchronous>, transform_indices = @transform_8, window_bounds = array<i64: 1, 1>}, {transform_indices = @transform_9, window_bounds = array<i64: 1, 512>}]} {
    %c0 = arith.constant 0 : index
    %c0_0 = arith.constant 0 : index
    %0 = vector.load %arg1[%c0, %c0_0] : memref<13x512xf32, #tpu.memory_space<vmem>>, vector<13x512xf32>
    %c0_1 = arith.constant 0 : index
    %c0_2 = arith.constant 0 : index
    %1 = vector.load %arg2[%c0_1, %c0_2] : memref<32x13xf32, #tpu.memory_space<vmem>>, vector<32x13xf32>
    %c0_3 = arith.constant 0 : index
    %c0_4 = arith.constant 0 : index
    %2 = vector.load %arg3[%c0_3, %c0_4] : memref<32x1xf32, #tpu.memory_space<vmem>>, vector<32x1xf32>
    %c0_5 = arith.constant 0 : index
    %c0_6 = arith.constant 0 : index
    %3 = vector.load %arg4[%c0_5, %c0_6] : memref<32x32xf32, #tpu.memory_space<vmem>>, vector<32x32xf32>
    %c0_7 = arith.constant 0 : index
    %c0_8 = arith.constant 0 : index
    %4 = vector.load %arg5[%c0_7, %c0_8] : memref<32x1xf32, #tpu.memory_space<vmem>>, vector<32x1xf32>
    %c0_9 = arith.constant 0 : index
    %c0_10 = arith.constant 0 : index
    %5 = vector.load %arg6[%c0_9, %c0_10] : memref<32x32xf32, #tpu.memory_space<vmem>>, vector<32x32xf32>
    %c0_11 = arith.constant 0 : index
    %c0_12 = arith.constant 0 : index
    %6 = vector.load %arg7[%c0_11, %c0_12] : memref<32x1xf32, #tpu.memory_space<vmem>>, vector<32x1xf32>
    %c0_13 = arith.constant 0 : index
    %c0_14 = arith.constant 0 : index
    %7 = vector.load %arg8[%c0_13, %c0_14] : memref<1x32xf32, #tpu.memory_space<vmem>>, vector<1x32xf32>
    %c0_15 = arith.constant 0 : index
    %c0_16 = arith.constant 0 : index
    %8 = vector.load %arg9[%c0_15, %c0_16] : memref<1x1xf32, #tpu.memory_space<vmem>>, vector<1x1xf32>
    %cst = arith.constant dense<0.000000e+00> : vector<32x512xf32>
    %9 = tpu.matmul %1, %0, %cst {dimension_numbers = #tpu.dot_dimension_numbers<[1], [0], [0], [1], [0, 0, 1, 1], [], []>} : vector<32x13xf32>, vector<13x512xf32>, vector<32x512xf32> -> vector<32x512xf32>
    %10 = vector.broadcast %2 : vector<32x1xf32> to vector<32x512xf32>
    %11 = arith.addf %9, %10 : vector<32x512xf32>
    %cst_17 = arith.constant 0.000000e+00 : f32
    %12 = vector.broadcast %cst_17 : f32 to vector<32x512xf32>
    %13 = arith.maximumf %11, %12 : vector<32x512xf32>
    %cst_18 = arith.constant dense<0.000000e+00> : vector<32x512xf32>
    %14 = tpu.matmul %3, %13, %cst_18 {dimension_numbers = #tpu.dot_dimension_numbers<[1], [0], [0], [1], [0, 0, 1, 1], [], []>} : vector<32x32xf32>, vector<32x512xf32>, vector<32x512xf32> -> vector<32x512xf32>
    %15 = vector.broadcast %4 : vector<32x1xf32> to vector<32x512xf32>
    %16 = arith.addf %14, %15 : vector<32x512xf32>
    %cst_19 = arith.constant 0.000000e+00 : f32
    %17 = vector.broadcast %cst_19 : f32 to vector<32x512xf32>
    %18 = arith.maximumf %16, %17 : vector<32x512xf32>
    %cst_20 = arith.constant dense<0.000000e+00> : vector<32x512xf32>
    %19 = tpu.matmul %5, %18, %cst_20 {dimension_numbers = #tpu.dot_dimension_numbers<[1], [0], [0], [1], [0, 0, 1, 1], [], []>} : vector<32x32xf32>, vector<32x512xf32>, vector<32x512xf32> -> vector<32x512xf32>
    %20 = vector.broadcast %6 : vector<32x1xf32> to vector<32x512xf32>
    %21 = arith.addf %19, %20 : vector<32x512xf32>
    %cst_21 = arith.constant 0.000000e+00 : f32
    %22 = vector.broadcast %cst_21 : f32 to vector<32x512xf32>
    %23 = arith.maximumf %21, %22 : vector<32x512xf32>
    %cst_22 = arith.constant dense<0.000000e+00> : vector<32x512xf32>
    %24 = tpu.matmul %5, %23, %cst_22 {dimension_numbers = #tpu.dot_dimension_numbers<[1], [0], [0], [1], [0, 0, 1, 1], [], []>} : vector<32x32xf32>, vector<32x512xf32>, vector<32x512xf32> -> vector<32x512xf32>
    %25 = vector.broadcast %6 : vector<32x1xf32> to vector<32x512xf32>
    %26 = arith.addf %24, %25 : vector<32x512xf32>
    %cst_23 = arith.constant 0.000000e+00 : f32
    %27 = vector.broadcast %cst_23 : f32 to vector<32x512xf32>
    %28 = arith.maximumf %26, %27 : vector<32x512xf32>
    %cst_24 = arith.constant dense<0.000000e+00> : vector<1x512xf32>
    %29 = tpu.matmul %7, %28, %cst_24 {dimension_numbers = #tpu.dot_dimension_numbers<[1], [0], [0], [1], [0, 0, 1, 1], [], []>} : vector<1x32xf32>, vector<32x512xf32>, vector<1x512xf32> -> vector<1x512xf32>
    %30 = vector.broadcast %8 : vector<1x1xf32> to vector<1x512xf32>
    %31 = arith.addf %29, %30 : vector<1x512xf32>
    %c0_25 = arith.constant 0 : index
    %c0_26 = arith.constant 0 : index
    %32 = vector.load %arg10[%c0_25, %c0_26] : memref<1x512xf32, #tpu.memory_space<vmem>>, vector<1x512xf32>
    tpu.vector_store %arg10[%c0_25, %c0_26], %31 {strides = array<i32>} : memref<1x512xf32, #tpu.memory_space<vmem>>, vector<1x512xf32>,
    return
  }
  func.func @transform_0(%arg0: i32) -> (i32, i32) {
    %c0_i32 = arith.constant 0 : i32
    %c0_i32_0 = arith.constant 0 : i32
    return %c0_i32, %arg0 : i32, i32
  }
  func.func @transform_1(%arg0: i32) -> (i32, i32) {
    %c0_i32 = arith.constant 0 : i32
    %c0_i32_0 = arith.constant 0 : i32
    %c0_i32_1 = arith.constant 0 : i32
    return %c0_i32, %c0_i32_0 : i32, i32
  }
  func.func @transform_2(%arg0: i32) -> (i32, i32) {
    %c0_i32 = arith.constant 0 : i32
    %c0_i32_0 = arith.constant 0 : i32
    %c0_i32_1 = arith.constant 0 : i32
    return %c0_i32, %c0_i32_0 : i32, i32
  }
  func.func @transform_3(%arg0: i32) -> (i32, i32) {
    %c0_i32 = arith.constant 0 : i32
    %c0_i32_0 = arith.constant 0 : i32
    %c0_i32_1 = arith.constant 0 : i32
    return %c0_i32, %c0_i32_0 : i32, i32
  }
  func.func @transform_4(%arg0: i32) -> (i32, i32) {
    %c0_i32 = arith.constant 0 : i32
    %c0_i32_0 = arith.constant 0 : i32
    %c0_i32_1 = arith.constant 0 : i32
    return %c0_i32, %c0_i32_0 : i32, i32
  }
  func.func @transform_5(%arg0: i32) -> (i32, i32) {
    %c0_i32 = arith.constant 0 : i32
    %c0_i32_0 = arith.constant 0 : i32
    %c0_i32_1 = arith.constant 0 : i32
    return %c0_i32, %c0_i32_0 : i32, i32
  }
  func.func @transform_6(%arg0: i32) -> (i32, i32) {
    %c0_i32 = arith.constant 0 : i32
    %c0_i32_0 = arith.constant 0 : i32
    %c0_i32_1 = arith.constant 0 : i32
    return %c0_i32, %c0_i32_0 : i32, i32
  }
  func.func @transform_7(%arg0: i32) -> (i32, i32) {
    %c0_i32 = arith.constant 0 : i32
    %c0_i32_0 = arith.constant 0 : i32
    %c0_i32_1 = arith.constant 0 : i32
    return %c0_i32, %c0_i32_0 : i32, i32
  }
  func.func @transform_8(%arg0: i32) -> (i32, i32) {
    %c0_i32 = arith.constant 0 : i32
    %c0_i32_0 = arith.constant 0 : i32
    %c0_i32_1 = arith.constant 0 : i32
    return %c0_i32, %c0_i32_0 : i32, i32
  }
  func.func @transform_9(%arg0: i32) -> (i32, i32) {
    %c0_i32 = arith.constant 0 : i32
    %c0_i32_0 = arith.constant 0 : i32
    return %c0_i32, %arg0 : i32, i32
  }
}

</mosaic_0001>

<llo_original>
// kernel: tpu_custom_call.1
$region0: #{tpu_custom_call.1}
  #allocation0 [shape = 'u32[]', space=smem, size = 0x4, offset = 0x4, fixed_abs, tag = 'smem constant byte address 0x4 - core index']
  #allocation1 [shape = 'u32[144,128]{1,0:T(1,128)}', space=vmem, size = 0x12000, scoped, tag = 'internal scratch']
  #allocation2 [shape = 'f32[1,1]{1,0:T(1,128)S(1)}', space=vmem, size = 0x200, scoped, tag = 'scoped memory for tpu_custom_call.1']
  %s0 = inlined_call_operand.vmem [shape: f32[13,512], index: 0, kind: input, shape index: {}]
  %s1 = inlined_call_operand.vmem [shape: f32[32,13], index: 1, kind: input, shape index: {}]
  %s2 = inlined_call_operand.vmem [shape: f32[32,1], index: 2, kind: input, shape index: {}]
  %s3 = inlined_call_operand.vmem [shape: f32[32,32], index: 3, kind: input, shape index: {}]
  %s4 = inlined_call_operand.vmem [shape: f32[32,1], index: 4, kind: input, shape index: {}]
  %s5 = inlined_call_operand.vmem [shape: f32[32,32], index: 5, kind: input, shape index: {}]
  %s6 = inlined_call_operand.vmem [shape: f32[32,1], index: 6, kind: input, shape index: {}]
  %s7 = inlined_call_operand.vmem [shape: f32[1,32], index: 7, kind: input, shape index: {}]
  %s8 = inlined_call_operand.<no memory space> [shape: f32[1,1], index: 8, kind: input, shape index: {}]
  %s9 = inlined_call_operand.hbm [shape: f32[1,512], index: 9, kind: output, shape index: {}]
  %s10 = sld [smem:[#allocation0]]
  $region46: #{tpu_custom_call.1} parent=0
    _
  %s12 = ssub.s32 1, %s10
  %s13 = scalar_select 0, %s12, %s10
  %v14 = vstv %s8
  %15 = vst [vmem:[#allocation2] sm:$0x1] %v14
  $region1: #{tpu_custom_call.1} parent=0
    #allocation3 [shape = 'u8[2048]{0}', space=vmem, size = 0x800, scoped, tag = 'output window, operand 0, single buffered']
    #allocation4 [shape = 's32[1]{0}', space=sflag, size = 0x4, scoped, tag = 'scoped memory for tpu_custom_call.1']
    %16 = vsyncpa [#allocation4], 0
    // Predicated region
    $region2: #{tpu_custom_call.1} parent=1 // pred_check
      _
    $region3: #{tpu_custom_call.1} parent=1 // pred_check_branch
      %18 = sbr.rel (0) target = $region5
    $region4: #{tpu_custom_call.1} parent=1 // pred_region
      _
    $region5: #{tpu_custom_call.1} parent=1 // pred_fallthru
      _
    // Predicated region
    $region6: #{tpu_custom_call.1} parent=1 // pred_check
      _
    $region7: #{tpu_custom_call.1} parent=1 // pred_check_branch
      %20 = sbr.rel (0) target = $region9
    $region8: #{tpu_custom_call.1} parent=1 // pred_region
      _
    $region9: #{tpu_custom_call.1} parent=1 // pred_fallthru
      _
    // Predicated region
    $region10: #{tpu_custom_call.1} parent=1 // pred_check
      _
    $region11: #{tpu_custom_call.1} parent=1 // pred_check_branch
      %22 = sbr.rel (0) target = $region13
    $region12: #{tpu_custom_call.1} parent=1 // pred_region
      _
    $region13: #{tpu_custom_call.1} parent=1 // pred_fallthru
      _
    // Predicated region
    $region14: #{tpu_custom_call.1} parent=1 // pred_check
      _
    $region15: #{tpu_custom_call.1} parent=1 // pred_check_branch
      %24 = sbr.rel (0) target = $region17
    $region16: #{tpu_custom_call.1} parent=1 // pred_region
      _
    $region17: #{tpu_custom_call.1} parent=1 // pred_fallthru
      _
    // Predicated region
    $region18: #{tpu_custom_call.1} parent=1 // pred_check
      _
    $region19: #{tpu_custom_call.1} parent=1 // pred_check_branch
      %26 = sbr.rel (0) target = $region21
    $region20: #{tpu_custom_call.1} parent=1 // pred_region
      _
    $region21: #{tpu_custom_call.1} parent=1 // pred_fallthru
      _
    // Predicated region
    $region22: #{tpu_custom_call.1} parent=1 // pred_check
      _
    $region23: #{tpu_custom_call.1} parent=1 // pred_check_branch
      %28 = sbr.rel (0) target = $region25
    $region24: #{tpu_custom_call.1} parent=1 // pred_region
      _
    $region25: #{tpu_custom_call.1} parent=1 // pred_fallthru
      _
    // Predicated region
    $region26: #{tpu_custom_call.1} parent=1 // pred_check
      _
    $region27: #{tpu_custom_call.1} parent=1 // pred_check_branch
      %30 = sbr.rel (0) target = $region29
    $region28: #{tpu_custom_call.1} parent=1 // pred_region
      _
    $region29: #{tpu_custom_call.1} parent=1 // pred_fallthru
      _
    // Predicated region
    $region30: #{tpu_custom_call.1} parent=1 // pred_check
      _
    $region31: #{tpu_custom_call.1} parent=1 // pred_check_branch
      %32 = sbr.rel (0) target = $region33
    $region32: #{tpu_custom_call.1} parent=1 // pred_region
      _
    $region33: #{tpu_custom_call.1} parent=1 // pred_fallthru
      _
    // Predicated region
    $region34: #{tpu_custom_call.1} parent=1 // pred_check
      _
    $region35: #{tpu_custom_call.1} parent=1 // pred_check_branch
      %34 = sbr.rel (0) target = $region37
    $region36: #{tpu_custom_call.1} parent=1 // pred_region
      _
    $region37: #{tpu_custom_call.1} parent=1 // pred_fallthru
      _
    %v35 = vld [vmem:[%s0] sm:$0xff]
    %v36 = vld [vmem:[%s0 + $0x8] sm:$0xff]
    %v37 = vld [vmem:[%s0 + $0x10] sm:$0xff]
    %v38 = vld [vmem:[%s0 + $0x18] sm:$0xff]
    %v39 = vld [vmem:[%s0 + $0x20] sm:$0x1f]
    %v40 = vld [vmem:[%s0 + $0x28] sm:$0x1f]
    %v41 = vld [vmem:[%s0 + $0x30] sm:$0x1f]
    %v42 = vld [vmem:[%s0 + $0x38] sm:$0x1f]
    %v43 = vld [vmem:[%s1] sm:$0xff]
    %v44 = vld [vmem:[%s1 + $0x8] sm:$0xff]
    %v45 = vld [vmem:[%s1 + $0x10] sm:$0xff]
    %v46 = vld [vmem:[%s1 + $0x18] sm:$0xff]
    %v47 = vld [vmem:[%s2] sm:$0xff]
    %v48 = vld [vmem:[%s2 + $0x8] sm:$0xff]
    %v49 = vld [vmem:[%s2 + $0x10] sm:$0xff]
    %v50 = vld [vmem:[%s2 + $0x18] sm:$0xff]
    %v51 = vld [vmem:[%s3] sm:$0xff]
    %v52 = vld [vmem:[%s3 + $0x8] sm:$0xff]
    %v53 = vld [vmem:[%s3 + $0x10] sm:$0xff]
    %v54 = vld [vmem:[%s3 + $0x18] sm:$0xff]
    %v55 = vld [vmem:[%s4] sm:$0xff]
    %v56 = vld [vmem:[%s4 + $0x8] sm:$0xff]
    %v57 = vld [vmem:[%s4 + $0x10] sm:$0xff]
    %v58 = vld [vmem:[%s4 + $0x18] sm:$0xff]
    %v59 = vld [vmem:[%s5] sm:$0xff]
    %v60 = vld [vmem:[%s5 + $0x8] sm:$0xff]
    %v61 = vld [vmem:[%s5 + $0x10] sm:$0xff]
    %v62 = vld [vmem:[%s5 + $0x18] sm:$0xff]
    %v63 = vld [vmem:[%s6] sm:$0xff]
    %v64 = vld [vmem:[%s6 + $0x8] sm:$0xff]
    %v65 = vld [vmem:[%s6 + $0x10] sm:$0xff]
    %v66 = vld [vmem:[%s6 + $0x18] sm:$0xff]
    %v67 = vld [vmem:[%s7] sm:$0x1]
    %v68 = vld [vmem:[#allocation2] sm:$0x1]
    %70 = vset.pattern.permute.xlu0 0
    %71 = vperm.xlu0 %70, %v47
    %v72 = vpop.permute.xlu0 %71
    %75 = vset.pattern.permute.xlu0 0
    %76 = vperm.xlu0 %75, %v48
    %v77 = vpop.permute.xlu0 %76
    %80 = vset.pattern.permute.xlu0 0
    %81 = vperm.xlu0 %80, %v49
    %v82 = vpop.permute.xlu0 %81
    %85 = vset.pattern.permute.xlu0 0
    %86 = vperm.xlu0 %85, %v50
    %v87 = vpop.permute.xlu0 %86
    %vm89 = vcmask 105472
    %v91 = vsel %vm89, %v43, 0
    %v94 = vsel %vm89, %v44, 0
    %v97 = vsel %vm89, %v45, 0
    %v100 = vsel %vm89, %v46, 0
    %vm102 = vcmask 1044480
    %v104 = vsel %vm102, %v39, 0
    %v107 = vsel %vm102, %v40, 0
    %v110 = vsel %vm102, %v41, 0
    %v113 = vsel %vm102, %v42, 0
    %115 = vmatprep.subr.mxu0 %v36
    %116 = vmatpush1.msra.mxu0 %v35
    %117 = vmatprep.subr.mxu0 %v107
    %118 = vmatpush1.msra.mxu0 %v104
    %119 = vmatprep.subr.mxu0 0.0
    %120 = vmatpush1.msra.mxu0 0.0
    %121 = vmatprep.subr.mxu0 0.0
    %122 = vmatpush1.msra.mxu0 0.0
    %123 = vmatprep.subr.mxu0 0.0
    %124 = vmatpush1.msra.mxu0 0.0
    %125 = vmatprep.subr.mxu0 0.0
    %126 = vmatpush1.msra.mxu0 0.0
    %127 = vmatprep.subr.mxu0 0.0
    %128 = vmatpush1.msra.mxu0 0.0
    %129 = vmatprep.subr.mxu0 0.0
    %130 = vmatpush1.msra.mxu0 0.0
    %131 = vmatprep.subr.mxu0 0.0
    %132 = vmatpush1.msra.mxu0 0.0
    %133 = vmatprep.subr.mxu0 0.0
    %134 = vmatpush1.msra.mxu0 0.0
    %135 = vmatprep.subr.mxu0 0.0
    %136 = vmatpush1.msra.mxu0 0.0
    %137 = vmatprep.subr.mxu0 0.0
    %138 = vmatpush1.msra.mxu0 0.0
    %139 = vmatprep.subr.mxu0 0.0
    %140 = vmatpush1.msra.mxu0 0.0
    %141 = vmatprep.subr.mxu0 0.0
    %142 = vmatpush1.msra.mxu0 0.0
    %143 = vmatprep.subr.mxu0 0.0
    %144 = vmatpush1.msra.mxu0 0.0
    %145 = vmatprep.subr.mxu0 0.0
    %146 = vmatpush1.msra.mxu0 0.0
    %147 = vmatprep.subr.mxu0 0.0
    %148 = vmatpush1.msra.mxu0 0.0
    %149 = vmatprep.subr.mxu0 0.0
    %150 = vmatpush1.msra.mxu0 0.0
    %151 = vmatprep.subr.mxu0 0.0
    %152 = vmatpush1.msra.mxu0 0.0
    %153 = vmatprep.subr.mxu0 0.0
    %154 = vmatpush1.msra.mxu0 0.0
    %155 = vmatprep.subr.mxu0 0.0
    %156 = vmatpush1.msra.mxu0 0.0
    %157 = vmatprep.subr.mxu0 0.0
    %158 = vmatpush1.msra.mxu0 0.0
    %159 = vmatprep.subr.mxu0 0.0
    %160 = vmatpush1.msra.mxu0 0.0
    %161 = vmatprep.subr.mxu0 0.0
    %162 = vmatpush1.msra.mxu0 0.0
    %163 = vmatprep.subr.mxu0 0.0
    %164 = vmatpush1.msra.mxu0 0.0
    %165 = vmatprep.subr.mxu0 0.0
    %166 = vmatpush1.msra.mxu0 0.0
    %167 = vmatprep.subr.mxu0 0.0
    %168 = vmatpush1.msra.mxu0 0.0
    %169 = vmatprep.subr.mxu0 0.0
    %170 = vmatpush1.msra.mxu0 0.0
    %171 = vmatprep.subr.mxu0 0.0
    %172 = vmatpush1.msra.mxu0 0.0
    %173 = vmatprep.subr.mxu0 0.0
    %174 = vmatpush1.msra.mxu0 0.0
    %175 = vmatprep.subr.mxu0 0.0
    %176 = vmatpush1.msra.mxu0 0.0
    %177 = vmatprep.subr.mxu0 0.0
    %178 = vmatpush1.msra.mxu0 0.0
    %179 = vmatprep.mubr.f32.mxu0 0.0
    %180 = vmatmul.mubr.f32.gmra.mrb[0].mxu0 %v91
    %v181 = vpop.f32.mrb[0].mxu0
    %v182 = vadd.f32 %v72, %v181
    %v183 = vpop.f32.mrb[0].mxu0
    %v184 = vadd.f32 %v72, %v183
    %185 = vmatprep.mubr.f32.mxu0 0.0
    %186 = vmatmul.mubr.f32.gmra.mrb[0].mxu0 %v94
    %v187 = vpop.f32.mrb[0].mxu0
    %v188 = vadd.f32 %v77, %v187
    %v189 = vpop.f32.mrb[0].mxu0
    %v190 = vadd.f32 %v77, %v189
    %191 = vmatprep.mubr.f32.mxu0 0.0
    %192 = vmatmul.mubr.f32.gmra.mrb[0].mxu0 %v97
    %v193 = vpop.f32.mrb[0].mxu0
    %v194 = vadd.f32 %v82, %v193
    %v195 = vpop.f32.mrb[0].mxu0
    %v196 = vadd.f32 %v82, %v195
    %197 = vmatprep.mubr.f32.mxu0 0.0
    %198 = vmatmul.mubr.f32.gmra.mrb[0].mxu0 %v100
    %v199 = vpop.f32.mrb[0].mxu0
    %v200 = vadd.f32 %v87, %v199
    %v201 = vpop.f32.mrb[0].mxu0
    %v202 = vadd.f32 %v87, %v201
    %203 = vdwg.mxu0
    %204 = vmatprep.subr.mxu0 %v38
    %205 = vmatpush1.msra.mxu0 %v37
    %206 = vmatprep.subr.mxu0 %v113
    %207 = vmatpush1.msra.mxu0 %v110
    %208 = vmatprep.subr.mxu0 0.0
    %209 = vmatpush1.msra.mxu0 0.0
    %210 = vmatprep.subr.mxu0 0.0
    %211 = vmatpush1.msra.mxu0 0.0
    %212 = vmatprep.subr.mxu0 0.0
    %213 = vmatpush1.msra.mxu0 0.0
    %214 = vmatprep.subr.mxu0 0.0
    %215 = vmatpush1.msra.mxu0 0.0
    %216 = vmatprep.subr.mxu0 0.0
    %217 = vmatpush1.msra.mxu0 0.0
    %218 = vmatprep.subr.mxu0 0.0
    %219 = vmatpush1.msra.mxu0 0.0
    %220 = vmatprep.subr.mxu0 0.0
    %221 = vmatpush1.msra.mxu0 0.0
    %222 = vmatprep.subr.mxu0 0.0
    %223 = vmatpush1.msra.mxu0 0.0
    %224 = vmatprep.subr.mxu0 0.0
    %225 = vmatpush1.msra.mxu0 0.0
    %226 = vmatprep.subr.mxu0 0.0
    %227 = vmatpush1.msra.mxu0 0.0
    %228 = vmatprep.subr.mxu0 0.0
    %229 = vmatpush1.msra.mxu0 0.0
    %230 = vmatprep.subr.mxu0 0.0
    %231 = vmatpush1.msra.mxu0 0.0
    %232 = vmatprep.subr.mxu0 0.0
    %233 = vmatpush1.msra.mxu0 0.0
    %234 = vmatprep.subr.mxu0 0.0
    %235 = vmatpush1.msra.mxu0 0.0
    %236 = vmatprep.subr.mxu0 0.0
    %237 = vmatpush1.msra.mxu0 0.0
    %238 = vmatprep.subr.mxu0 0.0
    %239 = vmatpush1.msra.mxu0 0.0
    %240 = vmatprep.subr.mxu0 0.0
    %241 = vmatpush1.msra.mxu0 0.0
    %242 = vmatprep.subr.mxu0 0.0
    %243 = vmatpush1.msra.mxu0 0.0
    %244 = vmatprep.subr.mxu0 0.0
    %245 = vmatpush1.msra.mxu0 0.0
    %246 = vmatprep.subr.mxu0 0.0
    %247 = vmatpush1.msra.mxu0 0.0
    %248 = vmatprep.subr.mxu0 0.0
    %249 = vmatpush1.msra.mxu0 0.0
    %250 = vmatprep.subr.mxu0 0.0
    %251 = vmatpush1.msra.mxu0 0.0
    %252 = vmatprep.subr.mxu0 0.0
    %253 = vmatpush1.msra.mxu0 0.0
    %254 = vmatprep.subr.mxu0 0.0
    %255 = vmatpush1.msra.mxu0 0.0
    %256 = vmatprep.subr.mxu0 0.0
    %257 = vmatpush1.msra.mxu0 0.0
    %258 = vmatprep.subr.mxu0 0.0
    %259 = vmatpush1.msra.mxu0 0.0
    %260 = vmatprep.subr.mxu0 0.0
    %261 = vmatpush1.msra.mxu0 0.0
    %262 = vmatprep.subr.mxu0 0.0
    %263 = vmatpush1.msra.mxu0 0.0
    %264 = vmatprep.subr.mxu0 0.0
    %265 = vmatpush1.msra.mxu0 0.0
    %266 = vmatprep.subr.mxu0 0.0
    %267 = vmatpush1.msra.mxu0 0.0
    %268 = vmatprep.mubr.f32.mxu0 0.0
    %269 = vmatmul.mubr.f32.gmra.mrb[0].mxu0 %v91
    %v270 = vpop.f32.mrb[0].mxu0
    %v271 = vadd.f32 %v72, %v270
    %v272 = vpop.f32.mrb[0].mxu0
    %v273 = vadd.f32 %v72, %v272
    %274 = vmatprep.mubr.f32.mxu0 0.0
    %275 = vmatmul.mubr.f32.gmra.mrb[0].mxu0 %v94
    %v276 = vpop.f32.mrb[0].mxu0
    %v277 = vadd.f32 %v77, %v276
    %v278 = vpop.f32.mrb[0].mxu0
    %v279 = vadd.f32 %v77, %v278
    %280 = vmatprep.mubr.f32.mxu0 0.0
    %281 = vmatmul.mubr.f32.gmra.mrb[0].mxu0 %v97
    %v282 = vpop.f32.mrb[0].mxu0
    %v283 = vadd.f32 %v82, %v282
    %v284 = vpop.f32.mrb[0].mxu0
    %v285 = vadd.f32 %v82, %v284
    %286 = vmatprep.mubr.f32.mxu0 0.0
    %287 = vmatmul.mubr.f32.gmra.mrb[0].mxu0 %v100
    %v288 = vpop.f32.mrb[0].mxu0
    %v289 = vadd.f32 %v87, %v288
    %v290 = vpop.f32.mrb[0].mxu0
    %v291 = vadd.f32 %v87, %v290
    %292 = vdwg.mxu0
    %v293 = vmax.f32 %v182, 0.0
    %v294 = vmax.f32 %v184, 0.0
    %v295 = vmax.f32 %v271, 0.0
    %v296 = vmax.f32 %v273, 0.0
    %v297 = vmax.f32 %v188, 0.0
    %v298 = vmax.f32 %v190, 0.0
    %v299 = vmax.f32 %v277, 0.0
    %v300 = vmax.f32 %v279, 0.0
    %v301 = vmax.f32 %v194, 0.0
    %v302 = vmax.f32 %v196, 0.0
    %v303 = vmax.f32 %v283, 0.0
    %v304 = vmax.f32 %v285, 0.0
    %v305 = vmax.f32 %v200, 0.0
    %v306 = vmax.f32 %v202, 0.0
    %v307 = vmax.f32 %v289, 0.0
    %v308 = vmax.f32 %v291, 0.0
    %310 = vset.pattern.permute.xlu0 0
    %311 = vperm.xlu0 %310, %v55
    %v312 = vpop.permute.xlu0 %311
    %315 = vset.pattern.permute.xlu0 0
    %316 = vperm.xlu0 %315, %v56
    %v317 = vpop.permute.xlu0 %316
    %320 = vset.pattern.permute.xlu0 0
    %321 = vperm.xlu0 %320, %v57
    %v322 = vpop.permute.xlu0 %321
    %325 = vset.pattern.permute.xlu0 0
    %326 = vperm.xlu0 %325, %v58
    %v327 = vpop.permute.xlu0 %326
    %vm329 = vcmask 261120
    %v331 = vsel %vm329, %v51, 0
    %v334 = vsel %vm329, %v52, 0
    %v337 = vsel %vm329, %v53, 0
    %v340 = vsel %vm329, %v54, 0
    %342 = vmatprep.subr.mxu0 %v294
    %343 = vmatpush1.msra.mxu0 %v293
    %344 = vmatprep.subr.mxu0 %v298
    %345 = vmatpush1.msra.mxu0 %v297
    %346 = vmatprep.subr.mxu0 %v302
    %347 = vmatpush1.msra.mxu0 %v301
    %348 = vmatprep.subr.mxu0 %v306
    %349 = vmatpush1.msra.mxu0 %v305
    %350 = vmatprep.subr.mxu0 0.0
    %351 = vmatpush1.msra.mxu0 0.0
    %352 = vmatprep.subr.mxu0 0.0
    %353 = vmatpush1.msra.mxu0 0.0
    %354 = vmatprep.subr.mxu0 0.0
    %355 = vmatpush1.msra.mxu0 0.0
    %356 = vmatprep.subr.mxu0 0.0
    %357 = vmatpush1.msra.mxu0 0.0
    %358 = vmatprep.subr.mxu0 0.0
    %359 = vmatpush1.msra.mxu0 0.0
    %360 = vmatprep.subr.mxu0 0.0
    %361 = vmatpush1.msra.mxu0 0.0
    %362 = vmatprep.subr.mxu0 0.0
    %363 = vmatpush1.msra.mxu0 0.0
    %364 = vmatprep.subr.mxu0 0.0
    %365 = vmatpush1.msra.mxu0 0.0
    %366 = vmatprep.subr.mxu0 0.0
    %367 = vmatpush1.msra.mxu0 0.0
    %368 = vmatprep.subr.mxu0 0.0
    %369 = vmatpush1.msra.mxu0 0.0
    %370 = vmatprep.subr.mxu0 0.0
    %371 = vmatpush1.msra.mxu0 0.0
    %372 = vmatprep.subr.mxu0 0.0
    %373 = vmatpush1.msra.mxu0 0.0
    %374 = vmatprep.subr.mxu0 0.0
    %375 = vmatpush1.msra.mxu0 0.0
    %376 = vmatprep.subr.mxu0 0.0
    %377 = vmatpush1.msra.mxu0 0.0
    %378 = vmatprep.subr.mxu0 0.0
    %379 = vmatpush1.msra.mxu0 0.0
    %380 = vmatprep.subr.mxu0 0.0
    %381 = vmatpush1.msra.mxu0 0.0
    %382 = vmatprep.subr.mxu0 0.0
    %383 = vmatpush1.msra.mxu0 0.0
    %384 = vmatprep.subr.mxu0 0.0
    %385 = vmatpush1.msra.mxu0 0.0
    %386 = vmatprep.subr.mxu0 0.0
    %387 = vmatpush1.msra.mxu0 0.0
    %388 = vmatprep.subr.mxu0 0.0
    %389 = vmatpush1.msra.mxu0 0.0
    %390 = vmatprep.subr.mxu0 0.0
    %391 = vmatpush1.msra.mxu0 0.0
    %392 = vmatprep.subr.mxu0 0.0
    %393 = vmatpush1.msra.mxu0 0.0
    %394 = vmatprep.subr.mxu0 0.0
    %395 = vmatpush1.msra.mxu0 0.0
    %396 = vmatprep.subr.mxu0 0.0
    %397 = vmatpush1.msra.mxu0 0.0
    %398 = vmatprep.subr.mxu0 0.0
    %399 = vmatpush1.msra.mxu0 0.0
    %400 = vmatprep.subr.mxu0 0.0
    %401 = vmatpush1.msra.mxu0 0.0
    %402 = vmatprep.subr.mxu0 0.0
    %403 = vmatpush1.msra.mxu0 0.0
    %404 = vmatprep.subr.mxu0 0.0
    %405 = vmatpush1.msra.mxu0 0.0
    %406 = vmatprep.mubr.f32.mxu0 0.0
    %407 = vmatmul.mubr.f32.gmra.mrb[0].mxu0 %v331
    %v408 = vpop.f32.mrb[0].mxu0
    %v409 = vadd.f32 %v312, %v408
    %v410 = vpop.f32.mrb[0].mxu0
    %v411 = vadd.f32 %v312, %v410
    %412 = vmatprep.mubr.f32.mxu0 0.0
    %413 = vmatmul.mubr.f32.gmra.mrb[0].mxu0 %v334
    %v414 = vpop.f32.mrb[0].mxu0
    %v415 = vadd.f32 %v317, %v414
    %v416 = vpop.f32.mrb[0].mxu0
    %v417 = vadd.f32 %v317, %v416
    %418 = vmatprep.mubr.f32.mxu0 0.0
    %419 = vmatmul.mubr.f32.gmra.mrb[0].mxu0 %v337
    %v420 = vpop.f32.mrb[0].mxu0
    %v421 = vadd.f32 %v322, %v420
    %v422 = vpop.f32.mrb[0].mxu0
    %v423 = vadd.f32 %v322, %v422
    %424 = vmatprep.mubr.f32.mxu0 0.0
    %425 = vmatmul.mubr.f32.gmra.mrb[0].mxu0 %v340
    %v426 = vpop.f32.mrb[0].mxu0
    %v427 = vadd.f32 %v327, %v426
    %v428 = vpop.f32.mrb[0].mxu0
    %v429 = vadd.f32 %v327, %v428
    %430 = vdwg.mxu0
    %431 = vmatprep.subr.mxu0 %v296
    %432 = vmatpush1.msra.mxu0 %v295
    %433 = vmatprep.subr.mxu0 %v300
    %434 = vmatpush1.msra.mxu0 %v299
    %435 = vmatprep.subr.mxu0 %v304
    %436 = vmatpush1.msra.mxu0 %v303
    %437 = vmatprep.subr.mxu0 %v308
    %438 = vmatpush1.msra.mxu0 %v307
    %439 = vmatprep.subr.mxu0 0.0
    %440 = vmatpush1.msra.mxu0 0.0
    %441 = vmatprep.subr.mxu0 0.0
    %442 = vmatpush1.msra.mxu0 0.0
    %443 = vmatprep.subr.mxu0 0.0
    %444 = vmatpush1.msra.mxu0 0.0
    %445 = vmatprep.subr.mxu0 0.0
    %446 = vmatpush1.msra.mxu0 0.0
    %447 = vmatprep.subr.mxu0 0.0
    %448 = vmatpush1.msra.mxu0 0.0
    %449 = vmatprep.subr.mxu0 0.0
    %450 = vmatpush1.msra.mxu0 0.0
    %451 = vmatprep.subr.mxu0 0.0
    %452 = vmatpush1.msra.mxu0 0.0
    %453 = vmatprep.subr.mxu0 0.0
    %454 = vmatpush1.msra.mxu0 0.0
    %455 = vmatprep.subr.mxu0 0.0
    %456 = vmatpush1.msra.mxu0 0.0
    %457 = vmatprep.subr.mxu0 0.0
    %458 = vmatpush1.msra.mxu0 0.0
    %459 = vmatprep.subr.mxu0 0.0
    %460 = vmatpush1.msra.mxu0 0.0
    %461 = vmatprep.subr.mxu0 0.0
    %462 = vmatpush1.msra.mxu0 0.0
    %463 = vmatprep.subr.mxu0 0.0
    %464 = vmatpush1.msra.mxu0 0.0
    %465 = vmatprep.subr.mxu0 0.0
    %466 = vmatpush1.msra.mxu0 0.0
    %467 = vmatprep.subr.mxu0 0.0
    %468 = vmatpush1.msra.mxu0 0.0
    %469 = vmatprep.subr.mxu0 0.0
    %470 = vmatpush1.msra.mxu0 0.0
    %471 = vmatprep.subr.mxu0 0.0
    %472 = vmatpush1.msra.mxu0 0.0
    %473 = vmatprep.subr.mxu0 0.0
    %474 = vmatpush1.msra.mxu0 0.0
    %475 = vmatprep.subr.mxu0 0.0
    %476 = vmatpush1.msra.mxu0 0.0
    %477 = vmatprep.subr.mxu0 0.0
    %478 = vmatpush1.msra.mxu0 0.0
    %479 = vmatprep.subr.mxu0 0.0
    %480 = vmatpush1.msra.mxu0 0.0
    %481 = vmatprep.subr.mxu0 0.0
    %482 = vmatpush1.msra.mxu0 0.0
    %483 = vmatprep.subr.mxu0 0.0
    %484 = vmatpush1.msra.mxu0 0.0
    %485 = vmatprep.subr.mxu0 0.0
    %486 = vmatpush1.msra.mxu0 0.0
    %487 = vmatprep.subr.mxu0 0.0
    %488 = vmatpush1.msra.mxu0 0.0
    %489 = vmatprep.subr.mxu0 0.0
    %490 = vmatpush1.msra.mxu0 0.0
    %491 = vmatprep.subr.mxu0 0.0
    %492 = vmatpush1.msra.mxu0 0.0
    %493 = vmatprep.subr.mxu0 0.0
    %494 = vmatpush1.msra.mxu0 0.0
    %495 = vmatprep.mubr.f32.mxu0 0.0
    %496 = vmatmul.mubr.f32.gmra.mrb[0].mxu0 %v331
    %v497 = vpop.f32.mrb[0].mxu0
    %v498 = vadd.f32 %v312, %v497
    %v499 = vpop.f32.mrb[0].mxu0
    %v500 = vadd.f32 %v312, %v499
    %501 = vmatprep.mubr.f32.mxu0 0.0
    %502 = vmatmul.mubr.f32.gmra.mrb[0].mxu0 %v334
    %v503 = vpop.f32.mrb[0].mxu0
    %v504 = vadd.f32 %v317, %v503
    %v505 = vpop.f32.mrb[0].mxu0
    %v506 = vadd.f32 %v317, %v505
    %507 = vmatprep.mubr.f32.mxu0 0.0
    %508 = vmatmul.mubr.f32.gmra.mrb[0].mxu0 %v337
    %v509 = vpop.f32.mrb[0].mxu0
    %v510 = vadd.f32 %v322, %v509
    %v511 = vpop.f32.mrb[0].mxu0
    %v512 = vadd.f32 %v322, %v511
    %513 = vmatprep.mubr.f32.mxu0 0.0
    %514 = vmatmul.mubr.f32.gmra.mrb[0].mxu0 %v340
    %v515 = vpop.f32.mrb[0].mxu0
    %v516 = vadd.f32 %v327, %v515
    %v517 = vpop.f32.mrb[0].mxu0
    %v518 = vadd.f32 %v327, %v517
    %519 = vdwg.mxu0
    %v520 = vmax.f32 %v409, 0.0
    %v521 = vmax.f32 %v411, 0.0
    %v522 = vmax.f32 %v498, 0.0
    %v523 = vmax.f32 %v500, 0.0
    %v524 = vmax.f32 %v415, 0.0
    %v525 = vmax.f32 %v417, 0.0
    %v526 = vmax.f32 %v504, 0.0
    %v527 = vmax.f32 %v506, 0.0
    %v528 = vmax.f32 %v421, 0.0
    %v529 = vmax.f32 %v423, 0.0
    %v530 = vmax.f32 %v510, 0.0
    %v531 = vmax.f32 %v512, 0.0
    %v532 = vmax.f32 %v427, 0.0
    %v533 = vmax.f32 %v429, 0.0
    %v534 = vmax.f32 %v516, 0.0
    %v535 = vmax.f32 %v518, 0.0
    %537 = vset.pattern.permute.xlu0 0
    %538 = vperm.xlu0 %537, %v63
    %v539 = vpop.permute.xlu0 %538
    %542 = vset.pattern.permute.xlu0 0
    %543 = vperm.xlu0 %542, %v64
    %v544 = vpop.permute.xlu0 %543
    %547 = vset.pattern.permute.xlu0 0
    %548 = vperm.xlu0 %547, %v65
    %v549 = vpop.permute.xlu0 %548
    %552 = vset.pattern.permute.xlu0 0
    %553 = vperm.xlu0 %552, %v66
    %v554 = vpop.permute.xlu0 %553
    %v557 = vsel %vm329, %v59, 0
    %v560 = vsel %vm329, %v60, 0
    %v563 = vsel %vm329, %v61, 0
    %v566 = vsel %vm329, %v62, 0
    %568 = vmatprep.subr.mxu0 %v521
    %569 = vmatpush1.msra.mxu0 %v520
    %570 = vmatprep.subr.mxu0 %v525
    %571 = vmatpush1.msra.mxu0 %v524
    %572 = vmatprep.subr.mxu0 %v529
    %573 = vmatpush1.msra.mxu0 %v528
    %574 = vmatprep.subr.mxu0 %v533
    %575 = vmatpush1.msra.mxu0 %v532
    %576 = vmatprep.subr.mxu0 0.0
    %577 = vmatpush1.msra.mxu0 0.0
    %578 = vmatprep.subr.mxu0 0.0
    %579 = vmatpush1.msra.mxu0 0.0
    %580 = vmatprep.subr.mxu0 0.0
    %581 = vmatpush1.msra.mxu0 0.0
    %582 = vmatprep.subr.mxu0 0.0
    %583 = vmatpush1.msra.mxu0 0.0
    %584 = vmatprep.subr.mxu0 0.0
    %585 = vmatpush1.msra.mxu0 0.0
    %586 = vmatprep.subr.mxu0 0.0
    %587 = vmatpush1.msra.mxu0 0.0
    %588 = vmatprep.subr.mxu0 0.0
    %589 = vmatpush1.msra.mxu0 0.0
    %590 = vmatprep.subr.mxu0 0.0
    %591 = vmatpush1.msra.mxu0 0.0
    %592 = vmatprep.subr.mxu0 0.0
    %593 = vmatpush1.msra.mxu0 0.0
    %594 = vmatprep.subr.mxu0 0.0
    %595 = vmatpush1.msra.mxu0 0.0
    %596 = vmatprep.subr.mxu0 0.0
    %597 = vmatpush1.msra.mxu0 0.0
    %598 = vmatprep.subr.mxu0 0.0
    %599 = vmatpush1.msra.mxu0 0.0
    %600 = vmatprep.subr.mxu0 0.0
    %601 = vmatpush1.msra.mxu0 0.0
    %602 = vmatprep.subr.mxu0 0.0
    %603 = vmatpush1.msra.mxu0 0.0
    %604 = vmatprep.subr.mxu0 0.0
    %605 = vmatpush1.msra.mxu0 0.0
    %606 = vmatprep.subr.mxu0 0.0
    %607 = vmatpush1.msra.mxu0 0.0
    %608 = vmatprep.subr.mxu0 0.0
    %609 = vmatpush1.msra.mxu0 0.0
    %610 = vmatprep.subr.mxu0 0.0
    %611 = vmatpush1.msra.mxu0 0.0
    %612 = vmatprep.subr.mxu0 0.0
    %613 = vmatpush1.msra.mxu0 0.0
    %614 = vmatprep.subr.mxu0 0.0
    %615 = vmatpush1.msra.mxu0 0.0
    %616 = vmatprep.subr.mxu0 0.0
    %617 = vmatpush1.msra.mxu0 0.0
    %618 = vmatprep.subr.mxu0 0.0
    %619 = vmatpush1.msra.mxu0 0.0
    %620 = vmatprep.subr.mxu0 0.0
    %621 = vmatpush1.msra.mxu0 0.0
    %622 = vmatprep.subr.mxu0 0.0
    %623 = vmatpush1.msra.mxu0 0.0
    %624 = vmatprep.subr.mxu0 0.0
    %625 = vmatpush1.msra.mxu0 0.0
    %626 = vmatprep.subr.mxu0 0.0
    %627 = vmatpush1.msra.mxu0 0.0
    %628 = vmatprep.subr.mxu0 0.0
    %629 = vmatpush1.msra.mxu0 0.0
    %630 = vmatprep.subr.mxu0 0.0
    %631 = vmatpush1.msra.mxu0 0.0
    %632 = vmatprep.mubr.f32.mxu0 0.0
    %633 = vmatmul.mubr.f32.gmra.mrb[0].mxu0 %v557
    %v634 = vpop.f32.mrb[0].mxu0
    %v635 = vadd.f32 %v539, %v634
    %v636 = vpop.f32.mrb[0].mxu0
    %v637 = vadd.f32 %v539, %v636
    %638 = vmatprep.mubr.f32.mxu0 0.0
    %639 = vmatmul.mubr.f32.gmra.mrb[0].mxu0 %v560
    %v640 = vpop.f32.mrb[0].mxu0
    %v641 = vadd.f32 %v544, %v640
    %v642 = vpop.f32.mrb[0].mxu0
    %v643 = vadd.f32 %v544, %v642
    %644 = vmatprep.mubr.f32.mxu0 0.0
    %645 = vmatmul.mubr.f32.gmra.mrb[0].mxu0 %v563
    %v646 = vpop.f32.mrb[0].mxu0
    %v647 = vadd.f32 %v549, %v646
    %v648 = vpop.f32.mrb[0].mxu0
    %v649 = vadd.f32 %v549, %v648
    %650 = vmatprep.mubr.f32.mxu0 0.0
    %651 = vmatmul.mubr.f32.gmra.mrb[0].mxu0 %v566
    %v652 = vpop.f32.mrb[0].mxu0
    %v653 = vadd.f32 %v554, %v652
    %v654 = vpop.f32.mrb[0].mxu0
    %v655 = vadd.f32 %v554, %v654
    %656 = vdwg.mxu0
    %657 = vmatprep.subr.mxu0 %v523
    %658 = vmatpush1.msra.mxu0 %v522
    %659 = vmatprep.subr.mxu0 %v527
    %660 = vmatpush1.msra.mxu0 %v526
    %661 = vmatprep.subr.mxu0 %v531
    %662 = vmatpush1.msra.mxu0 %v530
    %663 = vmatprep.subr.mxu0 %v535
    %664 = vmatpush1.msra.mxu0 %v534
    %665 = vmatprep.subr.mxu0 0.0
    %666 = vmatpush1.msra.mxu0 0.0
    %667 = vmatprep.subr.mxu0 0.0
    %668 = vmatpush1.msra.mxu0 0.0
    %669 = vmatprep.subr.mxu0 0.0
    %670 = vmatpush1.msra.mxu0 0.0
    %671 = vmatprep.subr.mxu0 0.0
    %672 = vmatpush1.msra.mxu0 0.0
    %673 = vmatprep.subr.mxu0 0.0
    %674 = vmatpush1.msra.mxu0 0.0
    %675 = vmatprep.subr.mxu0 0.0
    %676 = vmatpush1.msra.mxu0 0.0
    %677 = vmatprep.subr.mxu0 0.0
    %678 = vmatpush1.msra.mxu0 0.0
    %679 = vmatprep.subr.mxu0 0.0
    %680 = vmatpush1.msra.mxu0 0.0
    %681 = vmatprep.subr.mxu0 0.0
    %682 = vmatpush1.msra.mxu0 0.0
    %683 = vmatprep.subr.mxu0 0.0
    %684 = vmatpush1.msra.mxu0 0.0
    %685 = vmatprep.subr.mxu0 0.0
    %686 = vmatpush1.msra.mxu0 0.0
    %687 = vmatprep.subr.mxu0 0.0
    %688 = vmatpush1.msra.mxu0 0.0
    %689 = vmatprep.subr.mxu0 0.0
    %690 = vmatpush1.msra.mxu0 0.0
    %691 = vmatprep.subr.mxu0 0.0
    %692 = vmatpush1.msra.mxu0 0.0
    %693 = vmatprep.subr.mxu0 0.0
    %694 = vmatpush1.msra.mxu0 0.0
    %695 = vmatprep.subr.mxu0 0.0
    %696 = vmatpush1.msra.mxu0 0.0
    %697 = vmatprep.subr.mxu0 0.0
    %698 = vmatpush1.msra.mxu0 0.0
    %699 = vmatprep.subr.mxu0 0.0
    %700 = vmatpush1.msra.mxu0 0.0
    %701 = vmatprep.subr.mxu0 0.0
    %702 = vmatpush1.msra.mxu0 0.0
    %703 = vmatprep.subr.mxu0 0.0
    %704 = vmatpush1.msra.mxu0 0.0
    %705 = vmatprep.subr.mxu0 0.0
    %706 = vmatpush1.msra.mxu0 0.0
    %707 = vmatprep.subr.mxu0 0.0
    %708 = vmatpush1.msra.mxu0 0.0
    %709 = vmatprep.subr.mxu0 0.0
    %710 = vmatpush1.msra.mxu0 0.0
    %711 = vmatprep.subr.mxu0 0.0
    %712 = vmatpush1.msra.mxu0 0.0
    %713 = vmatprep.subr.mxu0 0.0
    %714 = vmatpush1.msra.mxu0 0.0
    %715 = vmatprep.subr.mxu0 0.0
    %716 = vmatpush1.msra.mxu0 0.0
    %717 = vmatprep.subr.mxu0 0.0
    %718 = vmatpush1.msra.mxu0 0.0
    %719 = vmatprep.subr.mxu0 0.0
    %720 = vmatpush1.msra.mxu0 0.0
    %721 = vmatprep.mubr.f32.mxu0 0.0
    %722 = vmatmul.mubr.f32.gmra.mrb[0].mxu0 %v557
    %v723 = vpop.f32.mrb[0].mxu0
    %v724 = vadd.f32 %v539, %v723
    %v725 = vpop.f32.mrb[0].mxu0
    %v726 = vadd.f32 %v539, %v725
    %727 = vmatprep.mubr.f32.mxu0 0.0
    %728 = vmatmul.mubr.f32.gmra.mrb[0].mxu0 %v560
    %v729 = vpop.f32.mrb[0].mxu0
    %v730 = vadd.f32 %v544, %v729
    %v731 = vpop.f32.mrb[0].mxu0
    %v732 = vadd.f32 %v544, %v731
    %733 = vmatprep.mubr.f32.mxu0 0.0
    %734 = vmatmul.mubr.f32.gmra.mrb[0].mxu0 %v563
    %v735 = vpop.f32.mrb[0].mxu0
    %v736 = vadd.f32 %v549, %v735
    %v737 = vpop.f32.mrb[0].mxu0
    %v738 = vadd.f32 %v549, %v737
    %739 = vmatprep.mubr.f32.mxu0 0.0
    %740 = vmatmul.mubr.f32.gmra.mrb[0].mxu0 %v566
    %v741 = vpop.f32.mrb[0].mxu0
    %v742 = vadd.f32 %v554, %v741
    %v743 = vpop.f32.mrb[0].mxu0
    %v744 = vadd.f32 %v554, %v743
    %745 = vdwg.mxu0
    %v746 = vmax.f32 %v635, 0.0
    %v747 = vmax.f32 %v637, 0.0
    %v748 = vmax.f32 %v724, 0.0
    %v749 = vmax.f32 %v726, 0.0
    %v750 = vmax.f32 %v641, 0.0
    %v751 = vmax.f32 %v643, 0.0
    %v752 = vmax.f32 %v730, 0.0
    %v753 = vmax.f32 %v732, 0.0
    %v754 = vmax.f32 %v647, 0.0
    %v755 = vmax.f32 %v649, 0.0
    %v756 = vmax.f32 %v736, 0.0
    %v757 = vmax.f32 %v738, 0.0
    %v758 = vmax.f32 %v653, 0.0
    %v759 = vmax.f32 %v655, 0.0
    %v760 = vmax.f32 %v742, 0.0
    %v761 = vmax.f32 %v744, 0.0
    %762 = vmatprep.subr.mxu0 %v747
    %763 = vmatpush1.msra.mxu0 %v746
    %764 = vmatprep.subr.mxu0 %v751
    %765 = vmatpush1.msra.mxu0 %v750
    %766 = vmatprep.subr.mxu0 %v755
    %767 = vmatpush1.msra.mxu0 %v754
    %768 = vmatprep.subr.mxu0 %v759
    %769 = vmatpush1.msra.mxu0 %v758
    %770 = vmatprep.subr.mxu0 0.0
    %771 = vmatpush1.msra.mxu0 0.0
    %772 = vmatprep.subr.mxu0 0.0
    %773 = vmatpush1.msra.mxu0 0.0
    %774 = vmatprep.subr.mxu0 0.0
    %775 = vmatpush1.msra.mxu0 0.0
    %776 = vmatprep.subr.mxu0 0.0
    %777 = vmatpush1.msra.mxu0 0.0
    %778 = vmatprep.subr.mxu0 0.0
    %779 = vmatpush1.msra.mxu0 0.0
    %780 = vmatprep.subr.mxu0 0.0
    %781 = vmatpush1.msra.mxu0 0.0
    %782 = vmatprep.subr.mxu0 0.0
    %783 = vmatpush1.msra.mxu0 0.0
    %784 = vmatprep.subr.mxu0 0.0
    %785 = vmatpush1.msra.mxu0 0.0
    %786 = vmatprep.subr.mxu0 0.0
    %787 = vmatpush1.msra.mxu0 0.0
    %788 = vmatprep.subr.mxu0 0.0
    %789 = vmatpush1.msra.mxu0 0.0
    %790 = vmatprep.subr.mxu0 0.0
    %791 = vmatpush1.msra.mxu0 0.0
    %792 = vmatprep.subr.mxu0 0.0
    %793 = vmatpush1.msra.mxu0 0.0
    %794 = vmatprep.subr.mxu0 0.0
    %795 = vmatpush1.msra.mxu0 0.0
    %796 = vmatprep.subr.mxu0 0.0
    %797 = vmatpush1.msra.mxu0 0.0
    %798 = vmatprep.subr.mxu0 0.0
    %799 = vmatpush1.msra.mxu0 0.0
    %800 = vmatprep.subr.mxu0 0.0
    %801 = vmatpush1.msra.mxu0 0.0
    %802 = vmatprep.subr.mxu0 0.0
    %803 = vmatpush1.msra.mxu0 0.0
    %804 = vmatprep.subr.mxu0 0.0
    %805 = vmatpush1.msra.mxu0 0.0
    %806 = vmatprep.subr.mxu0 0.0
    %807 = vmatpush1.msra.mxu0 0.0
    %808 = vmatprep.subr.mxu0 0.0
    %809 = vmatpush1.msra.mxu0 0.0
    %810 = vmatprep.subr.mxu0 0.0
    %811 = vmatpush1.msra.mxu0 0.0
    %812 = vmatprep.subr.mxu0 0.0
    %813 = vmatpush1.msra.mxu0 0.0
    %814 = vmatprep.subr.mxu0 0.0
    %815 = vmatpush1.msra.mxu0 0.0
    %816 = vmatprep.subr.mxu0 0.0
    %817 = vmatpush1.msra.mxu0 0.0
    %818 = vmatprep.subr.mxu0 0.0
    %819 = vmatpush1.msra.mxu0 0.0
    %820 = vmatprep.subr.mxu0 0.0
    %821 = vmatpush1.msra.mxu0 0.0
    %822 = vmatprep.subr.mxu0 0.0
    %823 = vmatpush1.msra.mxu0 0.0
    %824 = vmatprep.subr.mxu0 0.0
    %825 = vmatpush1.msra.mxu0 0.0
    %826 = vmatprep.mubr.f32.mxu0 0.0
    %827 = vmatmul.mubr.f32.gmra.mrb[0].mxu0 %v557
    %v828 = vpop.f32.mrb[0].mxu0
    %v829 = vadd.f32 %v539, %v828
    %v830 = vpop.f32.mrb[0].mxu0
    %v831 = vadd.f32 %v539, %v830
    %832 = vmatprep.mubr.f32.mxu0 0.0
    %833 = vmatmul.mubr.f32.gmra.mrb[0].mxu0 %v560
    %v834 = vpop.f32.mrb[0].mxu0
    %v835 = vadd.f32 %v544, %v834
    %v836 = vpop.f32.mrb[0].mxu0
    %v837 = vadd.f32 %v544, %v836
    %838 = vmatprep.mubr.f32.mxu0 0.0
    %839 = vmatmul.mubr.f32.gmra.mrb[0].mxu0 %v563
    %v840 = vpop.f32.mrb[0].mxu0
    %v841 = vadd.f32 %v549, %v840
    %v842 = vpop.f32.mrb[0].mxu0
    %v843 = vadd.f32 %v549, %v842
    %844 = vmatprep.mubr.f32.mxu0 0.0
    %845 = vmatmul.mubr.f32.gmra.mrb[0].mxu0 %v566
    %v846 = vpop.f32.mrb[0].mxu0
    %v847 = vadd.f32 %v554, %v846
    %v848 = vpop.f32.mrb[0].mxu0
    %v849 = vadd.f32 %v554, %v848
    %850 = vdwg.mxu0
    %851 = vmatprep.subr.mxu0 %v749
    %852 = vmatpush1.msra.mxu0 %v748
    %853 = vmatprep.subr.mxu0 %v753
    %854 = vmatpush1.msra.mxu0 %v752
    %855 = vmatprep.subr.mxu0 %v757
    %856 = vmatpush1.msra.mxu0 %v756
    %857 = vmatprep.subr.mxu0 %v761
    %858 = vmatpush1.msra.mxu0 %v760
    %859 = vmatprep.subr.mxu0 0.0
    %860 = vmatpush1.msra.mxu0 0.0
    %861 = vmatprep.subr.mxu0 0.0
    %862 = vmatpush1.msra.mxu0 0.0
    %863 = vmatprep.subr.mxu0 0.0
    %864 = vmatpush1.msra.mxu0 0.0
    %865 = vmatprep.subr.mxu0 0.0
    %866 = vmatpush1.msra.mxu0 0.0
    %867 = vmatprep.subr.mxu0 0.0
    %868 = vmatpush1.msra.mxu0 0.0
    %869 = vmatprep.subr.mxu0 0.0
    %870 = vmatpush1.msra.mxu0 0.0
    %871 = vmatprep.subr.mxu0 0.0
    %872 = vmatpush1.msra.mxu0 0.0
    %873 = vmatprep.subr.mxu0 0.0
    %874 = vmatpush1.msra.mxu0 0.0
    %875 = vmatprep.subr.mxu0 0.0
    %876 = vmatpush1.msra.mxu0 0.0
    %877 = vmatprep.subr.mxu0 0.0
    %878 = vmatpush1.msra.mxu0 0.0
    %879 = vmatprep.subr.mxu0 0.0
    %880 = vmatpush1.msra.mxu0 0.0
    %881 = vmatprep.subr.mxu0 0.0
    %882 = vmatpush1.msra.mxu0 0.0
    %883 = vmatprep.subr.mxu0 0.0
    %884 = vmatpush1.msra.mxu0 0.0
    %885 = vmatprep.subr.mxu0 0.0
    %886 = vmatpush1.msra.mxu0 0.0
    %887 = vmatprep.subr.mxu0 0.0
    %888 = vmatpush1.msra.mxu0 0.0
    %889 = vmatprep.subr.mxu0 0.0
    %890 = vmatpush1.msra.mxu0 0.0
    %891 = vmatprep.subr.mxu0 0.0
    %892 = vmatpush1.msra.mxu0 0.0
    %893 = vmatprep.subr.mxu0 0.0
    %894 = vmatpush1.msra.mxu0 0.0
    %895 = vmatprep.subr.mxu0 0.0
    %896 = vmatpush1.msra.mxu0 0.0
    %897 = vmatprep.subr.mxu0 0.0
    %898 = vmatpush1.msra.mxu0 0.0
    %899 = vmatprep.subr.mxu0 0.0
    %900 = vmatpush1.msra.mxu0 0.0
    %901 = vmatprep.subr.mxu0 0.0
    %902 = vmatpush1.msra.mxu0 0.0
    %903 = vmatprep.subr.mxu0 0.0
    %904 = vmatpush1.msra.mxu0 0.0
    %905 = vmatprep.subr.mxu0 0.0
    %906 = vmatpush1.msra.mxu0 0.0
    %907 = vmatprep.subr.mxu0 0.0
    %908 = vmatpush1.msra.mxu0 0.0
    %909 = vmatprep.subr.mxu0 0.0
    %910 = vmatpush1.msra.mxu0 0.0
    %911 = vmatprep.subr.mxu0 0.0
    %912 = vmatpush1.msra.mxu0 0.0
    %913 = vmatprep.subr.mxu0 0.0
    %914 = vmatpush1.msra.mxu0 0.0
    %915 = vmatprep.mubr.f32.mxu0 0.0
    %916 = vmatmul.mubr.f32.gmra.mrb[0].mxu0 %v557
    %v917 = vpop.f32.mrb[0].mxu0
    %v918 = vadd.f32 %v539, %v917
    %v919 = vpop.f32.mrb[0].mxu0
    %v920 = vadd.f32 %v539, %v919
    %921 = vmatprep.mubr.f32.mxu0 0.0
    %922 = vmatmul.mubr.f32.gmra.mrb[0].mxu0 %v560
    %v923 = vpop.f32.mrb[0].mxu0
    %v924 = vadd.f32 %v544, %v923
    %v925 = vpop.f32.mrb[0].mxu0
    %v926 = vadd.f32 %v544, %v925
    %927 = vmatprep.mubr.f32.mxu0 0.0
    %928 = vmatmul.mubr.f32.gmra.mrb[0].mxu0 %v563
    %v929 = vpop.f32.mrb[0].mxu0
    %v930 = vadd.f32 %v549, %v929
    %v931 = vpop.f32.mrb[0].mxu0
    %v932 = vadd.f32 %v549, %v931
    %933 = vmatprep.mubr.f32.mxu0 0.0
    %934 = vmatmul.mubr.f32.gmra.mrb[0].mxu0 %v566
    %v935 = vpop.f32.mrb[0].mxu0
    %v936 = vadd.f32 %v554, %v935
    %v937 = vpop.f32.mrb[0].mxu0
    %v938 = vadd.f32 %v554, %v937
    %939 = vdwg.mxu0
    %v940 = vmax.f32 %v829, 0.0
    %v941 = vmax.f32 %v831, 0.0
    %v942 = vmax.f32 %v918, 0.0
    %v943 = vmax.f32 %v920, 0.0
    %v944 = vmax.f32 %v835, 0.0
    %v945 = vmax.f32 %v837, 0.0
    %v946 = vmax.f32 %v924, 0.0
    %v947 = vmax.f32 %v926, 0.0
    %v948 = vmax.f32 %v841, 0.0
    %v949 = vmax.f32 %v843, 0.0
    %v950 = vmax.f32 %v930, 0.0
    %v951 = vmax.f32 %v932, 0.0
    %v952 = vmax.f32 %v847, 0.0
    %v953 = vmax.f32 %v849, 0.0
    %v954 = vmax.f32 %v936, 0.0
    %v955 = vmax.f32 %v938, 0.0
    %957 = vset.pattern.permute.xlu0 0
    %958 = vperm.xlu0 %957, %v68
    %v959 = vpop.permute.xlu0 %958
    %v961 = vlaneseq
    %v962 = vshrl.u32 %v961, 7
    %v963 = vsub.s32 0, %v962
    %v964 = vrot.slane %v959, %v963
    %v966 = vsel %vm329, %v67, 0
    %968 = vmatprep.subr.mxu0 %v941
    %969 = vmatpush1.msra.mxu0 %v940
    %970 = vmatprep.subr.mxu0 %v945
    %971 = vmatpush1.msra.mxu0 %v944
    %972 = vmatprep.subr.mxu0 %v949
    %973 = vmatpush1.msra.mxu0 %v948
    %974 = vmatprep.subr.mxu0 %v953
    %975 = vmatpush1.msra.mxu0 %v952
    %976 = vmatprep.subr.mxu0 0.0
    %977 = vmatpush1.msra.mxu0 0.0
    %978 = vmatprep.subr.mxu0 0.0
    %979 = vmatpush1.msra.mxu0 0.0
    %980 = vmatprep.subr.mxu0 0.0
    %981 = vmatpush1.msra.mxu0 0.0
    %982 = vmatprep.subr.mxu0 0.0
    %983 = vmatpush1.msra.mxu0 0.0
    %984 = vmatprep.subr.mxu0 0.0
    %985 = vmatpush1.msra.mxu0 0.0
    %986 = vmatprep.subr.mxu0 0.0
    %987 = vmatpush1.msra.mxu0 0.0
    %988 = vmatprep.subr.mxu0 0.0
    %989 = vmatpush1.msra.mxu0 0.0
    %990 = vmatprep.subr.mxu0 0.0
    %991 = vmatpush1.msra.mxu0 0.0
    %992 = vmatprep.subr.mxu0 0.0
    %993 = vmatpush1.msra.mxu0 0.0
    %994 = vmatprep.subr.mxu0 0.0
    %995 = vmatpush1.msra.mxu0 0.0
    %996 = vmatprep.subr.mxu0 0.0
    %997 = vmatpush1.msra.mxu0 0.0
    %998 = vmatprep.subr.mxu0 0.0
    %999 = vmatpush1.msra.mxu0 0.0
    %1000 = vmatprep.subr.mxu0 0.0
    %1001 = vmatpush1.msra.mxu0 0.0
    %1002 = vmatprep.subr.mxu0 0.0
    %1003 = vmatpush1.msra.mxu0 0.0
    %1004 = vmatprep.subr.mxu0 0.0
    %1005 = vmatpush1.msra.mxu0 0.0
    %1006 = vmatprep.subr.mxu0 0.0
    %1007 = vmatpush1.msra.mxu0 0.0
    %1008 = vmatprep.subr.mxu0 0.0
    %1009 = vmatpush1.msra.mxu0 0.0
    %1010 = vmatprep.subr.mxu0 0.0
    %1011 = vmatpush1.msra.mxu0 0.0
    %1012 = vmatprep.subr.mxu0 0.0
    %1013 = vmatpush1.msra.mxu0 0.0
    %1014 = vmatprep.subr.mxu0 0.0
    %1015 = vmatpush1.msra.mxu0 0.0
    %1016 = vmatprep.subr.mxu0 0.0
    %1017 = vmatpush1.msra.mxu0 0.0
    %1018 = vmatprep.subr.mxu0 0.0
    %1019 = vmatpush1.msra.mxu0 0.0
    %1020 = vmatprep.subr.mxu0 0.0
    %1021 = vmatpush1.msra.mxu0 0.0
    %1022 = vmatprep.subr.mxu0 0.0
    %1023 = vmatpush1.msra.mxu0 0.0
    %1024 = vmatprep.subr.mxu0 0.0
    %1025 = vmatpush1.msra.mxu0 0.0
    %1026 = vmatprep.subr.mxu0 0.0
    %1027 = vmatpush1.msra.mxu0 0.0
    %1028 = vmatprep.subr.mxu0 0.0
    %1029 = vmatpush1.msra.mxu0 0.0
    %1030 = vmatprep.subr.mxu0 0.0
    %1031 = vmatpush1.msra.mxu0 0.0
    %1032 = vmatprep.mubr.f32.mxu0 0.0
    %1033 = vmatmul.mubr.f32.gmra.mrb[0].mxu0 %v966
    %v1034 = vpop.f32.mrb[0].mxu0
    %v1035 = vadd.f32 %v964, %v1034
    %v1036 = vpop.f32.mrb[0].mxu0
    %v1037 = vadd.f32 %v964, %v1036
    %1038 = vdwg.mxu0
    %1039 = vmatprep.subr.mxu0 %v943
    %1040 = vmatpush1.msra.mxu0 %v942
    %1041 = vmatprep.subr.mxu0 %v947
    %1042 = vmatpush1.msra.mxu0 %v946
    %1043 = vmatprep.subr.mxu0 %v951
    %1044 = vmatpush1.msra.mxu0 %v950
    %1045 = vmatprep.subr.mxu0 %v955
    %1046 = vmatpush1.msra.mxu0 %v954
    %1047 = vmatprep.subr.mxu0 0.0
    %1048 = vmatpush1.msra.mxu0 0.0
    %1049 = vmatprep.subr.mxu0 0.0
    %1050 = vmatpush1.msra.mxu0 0.0
    %1051 = vmatprep.subr.mxu0 0.0
    %1052 = vmatpush1.msra.mxu0 0.0
    %1053 = vmatprep.subr.mxu0 0.0
    %1054 = vmatpush1.msra.mxu0 0.0
    %1055 = vmatprep.subr.mxu0 0.0
    %1056 = vmatpush1.msra.mxu0 0.0
    %1057 = vmatprep.subr.mxu0 0.0
    %1058 = vmatpush1.msra.mxu0 0.0
    %1059 = vmatprep.subr.mxu0 0.0
    %1060 = vmatpush1.msra.mxu0 0.0
    %1061 = vmatprep.subr.mxu0 0.0
    %1062 = vmatpush1.msra.mxu0 0.0
    %1063 = vmatprep.subr.mxu0 0.0
    %1064 = vmatpush1.msra.mxu0 0.0
    %1065 = vmatprep.subr.mxu0 0.0
    %1066 = vmatpush1.msra.mxu0 0.0
    %1067 = vmatprep.subr.mxu0 0.0
    %1068 = vmatpush1.msra.mxu0 0.0
    %1069 = vmatprep.subr.mxu0 0.0
    %1070 = vmatpush1.msra.mxu0 0.0
    %1071 = vmatprep.subr.mxu0 0.0
    %1072 = vmatpush1.msra.mxu0 0.0
    %1073 = vmatprep.subr.mxu0 0.0
    %1074 = vmatpush1.msra.mxu0 0.0
    %1075 = vmatprep.subr.mxu0 0.0
    %1076 = vmatpush1.msra.mxu0 0.0
    %1077 = vmatprep.subr.mxu0 0.0
    %1078 = vmatpush1.msra.mxu0 0.0
    %1079 = vmatprep.subr.mxu0 0.0
    %1080 = vmatpush1.msra.mxu0 0.0
    %1081 = vmatprep.subr.mxu0 0.0
    %1082 = vmatpush1.msra.mxu0 0.0
    %1083 = vmatprep.subr.mxu0 0.0
    %1084 = vmatpush1.msra.mxu0 0.0
    %1085 = vmatprep.subr.mxu0 0.0
    %1086 = vmatpush1.msra.mxu0 0.0
    %1087 = vmatprep.subr.mxu0 0.0
    %1088 = vmatpush1.msra.mxu0 0.0
    %1089 = vmatprep.subr.mxu0 0.0
    %1090 = vmatpush1.msra.mxu0 0.0
    %1091 = vmatprep.subr.mxu0 0.0
    %1092 = vmatpush1.msra.mxu0 0.0
    %1093 = vmatprep.subr.mxu0 0.0
    %1094 = vmatpush1.msra.mxu0 0.0
    %1095 = vmatprep.subr.mxu0 0.0
    %1096 = vmatpush1.msra.mxu0 0.0
    %1097 = vmatprep.subr.mxu0 0.0
    %1098 = vmatpush1.msra.mxu0 0.0
    %1099 = vmatprep.subr.mxu0 0.0
    %1100 = vmatpush1.msra.mxu0 0.0
    %1101 = vmatprep.subr.mxu0 0.0
    %1102 = vmatpush1.msra.mxu0 0.0
    %1103 = vmatprep.mubr.f32.mxu0 0.0
    %1104 = vmatmul.mubr.f32.gmra.mrb[0].mxu0 %v966
    %v1105 = vpop.f32.mrb[0].mxu0
    %v1106 = vadd.f32 %v964, %v1105
    %v1107 = vpop.f32.mrb[0].mxu0
    %v1108 = vadd.f32 %v964, %v1107
    %1109 = vdwg.mxu0
    %v1114 = vcombine.low %v1035, %v1037
    %v1115 = vcombine.low %v1106, %v1108
    %v1117 = vunpack.c.l.s4 1966171168
    %v1118 = vunpack.c.0.s8 %v1117
    %v1119 = vlaneseq
    %v1120 = vshrl.u32 %v1119, 7
    %v1121 = vsub.s32 %v1118, %v1120
    %v1122 = vrot.slane %v1114, %v1121
    %v1124 = vunpack.c.l.s4 1966171168
    %v1125 = vunpack.c.0.s8 %v1124
    %v1126 = vlaneseq
    %v1127 = vshrl.u32 %v1126, 7
    %v1128 = vsub.s32 %v1125, %v1127
    %v1129 = vrot.slane %v1115, %v1128
    %v1130 = vcombine.low %v1122, %v1129
    %v1132 = vunpack.c.l.s4 1966171168
    %v1133 = vunpack.c.0.s8 %v1132
    %v1134 = vlaneseq
    %v1135 = vshrl.u32 %v1134, 7
    %v1136 = vsub.s32 %v1133, %v1135
    %v1137 = vrot.slane %v1130, %v1136
    %v1139 = vlaneseq
    %vm1140 = vcmp.ge.s32.totalorder %v1139, 0
    %vm1141 = vcmp.lt.s32.totalorder %v1139, 512
    %vm1142 = vmand %vm1140, %vm1141
    %1143 = vst.msk [vmem:[#allocation3] sm:$0xf] %vm1142, %v1137
    // Predicated region
    $region38: #{tpu_custom_call.1} parent=1 // pred_check
      _
    $region39: #{tpu_custom_call.1} parent=1 // pred_check_branch
      %1145 = sbr.rel (0) target = $region41
    $region40: #{tpu_custom_call.1} parent=1 // pred_region
      %s1147 = ssub.s32 64, 64
      %1148 = vsyncadd [#allocation4], %s1147
      %s1150 = sshll.u32 [#allocation3], 4
      %s1151 = int_to_ptr.vmem [resolvable:$true] %s1150
      %1153 = dma.vmem_to_hbm [thread:$0]  %s1151, 64, %s9, [#allocation4]
    $region41: #{tpu_custom_call.1} parent=1 // pred_fallthru
      _
    // Predicated region
    $region42: #{tpu_custom_call.1} parent=1 // pred_check
      _
    $region43: #{tpu_custom_call.1} parent=1 // pred_check_branch
      %1155 = sbr.rel (0) target = $region45
    $region44: #{tpu_custom_call.1} parent=1 // pred_region
      %1156 = dma.done [#allocation4], 64
    $region45: #{tpu_custom_call.1} parent=1 // pred_fallthru
      _
    %1157 = vsyncpa [#allocation4], 1

</llo_original>
